<compile_context>
chip_gen: v5e
topology: v5e:2x2
jax: 0.10.0
libtpu: 0.0.40
codegen_flags: <defaults>
</compile_context>

<pallas_src>
import jax
import jax.numpy as jnp
from jax.experimental import pallas as pl
from jax.experimental.pallas import tpu as pltpu


def _copy_kernel(x_ref, o_ref):
    # Identity copy of the current tile (pure DMA-bound streaming copy).
    o_ref[...] = x_ref[...]


def _resolve_shape(target_shape, total):
    """torch.view-style shape resolution (supports a single -1)."""
    shape = list(target_shape)
    neg = [i for i, s in enumerate(shape) if s == -1]
    if len(neg) > 1:
        raise ValueError("only one -1 allowed in shape")
    if neg:
        known = 1
        for s in shape:
            if s != -1:
                known *= s
        if known == 0 or total % known != 0:
            raise ValueError(f"cannot reshape {total} elements into {target_shape}")
        shape[neg[0]] = total // known
    prod = 1
    for s in shape:
        prod *= s
    if prod != total:
        raise ValueError(f"shape {target_shape} invalid for {total} elements")
    return tuple(shape)


def _choose_layout(total, itemsize):
    """Pick a lane-dense 2D slab (rows, lane_w) and a row-block size.

    lane_w: widest multiple of 128 (up to 1024) dividing `total`; if none
    divides, fall back to 128 and pad the tail (avoids the degenerate
    (1, total) layout that wastes 7/8 of every vreg and kills tiling).
    block_rows: ~4 MiB blocks (multiple of 8 sublanes) so that
    2 specs x 2 double-buffers x block fits comfortably in VMEM on all chips
    (notably v7x's 64 MiB).
    """
    lane_w = None
    for cand in (1024, 512, 256, 128):
        if total % cand == 0:
            lane_w = cand
            break
    if lane_w is None:
        lane_w = 128  # pad tail up to a multiple of 128

    rows = -(-total // lane_w)  # ceil

    target_block_bytes = 4 * 1024 * 1024
    max_block_rows = max(1, target_block_bytes // (lane_w * itemsize))
    if rows <= max_block_rows:
        block_rows = rows                      # single block == full row dim (allowed)
    else:
        block_rows = max(8, (max_block_rows // 8) * 8)   # sublane-aligned tile

    rows_padded = -(-rows // block_rows) * block_rows
    return lane_w, rows_padded, block_rows


def _pallas_copy(x_flat, total):
    """Streaming identity copy of a flat buffer through a tiled Pallas kernel."""
    itemsize = jnp.dtype(x_flat.dtype).itemsize
    lane_w, rows_padded, block_rows = _choose_layout(total, itemsize)
    padded_total = rows_padded * lane_w

    if padded_total != total:
        # Tail padding so every grid step sees a full, lane-dense block
        # (unmasked vst fast path).  Padding/slicing is wrapper-side glue.
        x_flat = jnp.pad(x_flat, (0, padded_total - total))
    x_2d = jnp.reshape(x_flat, (rows_padded, lane_w))

    grid = (rows_padded // block_rows,)
    copied = pl.pallas_call(
        _copy_kernel,
        out_shape=jax.ShapeDtypeStruct((rows_padded, lane_w), x_flat.dtype),
        grid=grid,
        in_specs=[pl.BlockSpec((block_rows, lane_w), lambda i: (i, 0))],
        out_specs=pl.BlockSpec((block_rows, lane_w), lambda i: (i, 0)),
        compiler_params=pltpu.CompilerParams(
            # Megacore/TC sharding of the mem-bound copy on v7x; harmless on v5e/v6e.
            dimension_semantics=("parallel",),
            # Headroom above v5e's 16 MiB default, safely under v7x's 64 MiB physical.
            vmem_limit_bytes=48 * 1024 * 1024,
        ),
        cost_estimate=pl.CostEstimate(
            flops=0,
            transcendentals=0,
            bytes_accessed=2 * total * itemsize,
        ),
    )(x_2d)

    out_flat = jnp.reshape(copied, (-1,))
    if padded_total != total:
        out_flat = out_flat[:total]
    return out_flat


class ReshapePallas:
    """JAX/Pallas equivalent of the PyTorch Reshape(nn.Module)."""

    def __init__(self, shape):
        self.shape = tuple(shape)

    def __call__(self, x):
        total = x.size
        out_shape = _resolve_shape(self.shape, total)
        if total == 0:
            # TODO(synk): nothing to copy; the reshape is pure metadata.
            return jnp.reshape(x, out_shape)
        out_flat = _pallas_copy(jnp.reshape(x, (-1,)), total)
        # The view/reshape itself is pure metadata (glue), matching torch.view
        # on a contiguous tensor.
        return jnp.reshape(out_flat, out_shape)


if __name__ == "__main__":
    key = jax.random.PRNGKey(0)

    # Small NCHW-like input consistent with a VAE encoder feature map.
    x = jax.random.normal(key, (2, 4, 16, 16), dtype=jnp.float32)

    # Reshape module flattening the conv feature map: (2, 4, 16, 16) -> (2, 1024)
    reshape_mod = ReshapePallas((-1, 4 * 16 * 16))
    y = jax.block_until_ready(reshape_mod(x))

    y_ref = jnp.reshape(x, (-1, 4 * 16 * 16))
    assert y.shape == (2, 1024), y.shape
    assert y.dtype == x.dtype
    assert bool(jnp.array_equal(y, y_ref)), "mismatch vs reference reshape"

    # Exercise the padded (total not a multiple of 128) path as well.
    x_odd = jax.random.normal(jax.random.PRNGKey(1), (3, 5, 7), dtype=jnp.float32)
    y_odd = jax.block_until_ready(ReshapePallas((-1,))(x_odd))
    assert y_odd.shape == (105,)
    assert bool(jnp.array_equal(y_odd, jnp.reshape(x_odd, (-1,)))), "odd-size mismatch"

    print("KERNEL_OK")
</pallas_src>

<mosaic_0001>
module attributes {stable_mosaic.version = 11 : i64} {
  func.func @_copy_kernel(%arg0: i32, %arg1: memref<2x1024xf32, #tpu.memory_space<vmem>>, %arg2: memref<2x1024xf32, #tpu.memory_space<vmem>>) attributes {dimension_semantics = [#tpu.dimension_semantics<parallel>], iteration_bounds = array<i64: 1>, scalar_prefetch = 0 : i64, scratch_operands = 0 : i64, tpu.core_type = #tpu.core_type<tc>, window_params = [{transform_indices = @transform_0, window_bounds = array<i64: 2, 1024>}, {transform_indices = @transform_1, window_bounds = array<i64: 2, 1024>}]} {
    %c0 = arith.constant 0 : index
    %c0_0 = arith.constant 0 : index
    %0 = vector.load %arg1[%c0, %c0_0] : memref<2x1024xf32, #tpu.memory_space<vmem>>, vector<2x1024xf32>
    %c0_1 = arith.constant 0 : index
    %c0_2 = arith.constant 0 : index
    %1 = vector.load %arg2[%c0_1, %c0_2] : memref<2x1024xf32, #tpu.memory_space<vmem>>, vector<2x1024xf32>
    tpu.vector_store %arg2[%c0_1, %c0_2], %0 {strides = array<i32>} : memref<2x1024xf32, #tpu.memory_space<vmem>>, vector<2x1024xf32>,
    return
  }
  func.func @transform_0(%arg0: i32) -> (i32, i32) {
    %c0_i32 = arith.constant 0 : i32
    %c0_i32_0 = arith.constant 0 : i32
    return %arg0, %c0_i32 : i32, i32
  }
  func.func @transform_1(%arg0: i32) -> (i32, i32) {
    %c0_i32 = arith.constant 0 : i32
    %c0_i32_0 = arith.constant 0 : i32
    return %arg0, %c0_i32 : i32, i32
  }
}

</mosaic_0001>

<llo_original>
// kernel: tpu_custom_call.1
$region0: #{tpu_custom_call.1}
  #allocation0 [shape = 'u32[]', space=smem, size = 0x4, offset = 0x4, fixed_abs, tag = 'smem constant byte address 0x4 - core index']
  #allocation1 [shape = 'u32[72,128]{1,0:T(1,128)}', space=vmem, size = 0x9000, scoped, tag = 'internal scratch']
  %s0 = inlined_call_operand.hbm [shape: f32[2,1024], index: 0, kind: input, shape index: {}]
  %s1 = inlined_call_operand.hbm [shape: f32[2,1024], index: 1, kind: output, shape index: {}]
  %s2 = sld [smem:[#allocation0]]
  $region18: #{tpu_custom_call.1} parent=0
    _
  %s4 = ssub.s32 1, %s2
  %s5 = scalar_select 0, %s4, %s2
  $region1: #{tpu_custom_call.1} parent=0
    #allocation2 [shape = 'u8[8192]{0}', space=vmem, size = 0x2000, scoped, tag = 'input window, operand 0, single buffered']
    #allocation3 [shape = 's32[1]{0}', space=sflag, size = 0x4, scoped, tag = 'scoped memory for tpu_custom_call.1']
    #allocation4 [shape = 's32[1]{0}', space=sflag, size = 0x4, scoped, tag = 'scoped memory for tpu_custom_call.1']
    #allocation5 [shape = 'u8[8192]{0}', space=vmem, size = 0x2000, scoped, tag = 'output window, operand 0, single buffered']
    %6 = vsyncpa [#allocation3], 0
    %7 = vsyncpa [#allocation4], 0
    // Predicated region
    $region2: #{tpu_custom_call.1} parent=1 // pred_check
      _
    $region3: #{tpu_custom_call.1} parent=1 // pred_check_branch
      %9 = sbr.rel (0) target = $region5
    $region4: #{tpu_custom_call.1} parent=1 // pred_region
      %11 = vsyncadd [#allocation3], 0
      %s13 = sshll.u32 %s0, 4
      %s14 = int_to_ptr.hbm [resolvable:$true] %s13
      %s15 = sshll.u32 [#allocation2], 4
      %s16 = int_to_ptr.vmem [resolvable:$true] %s15
      %18 = dma.hbm_to_vmem [thread:$0]  %s14, 256, %s16, [#allocation3]
    $region5: #{tpu_custom_call.1} parent=1 // pred_fallthru
      _
    // Predicated region
    $region6: #{tpu_custom_call.1} parent=1 // pred_check
      _
    $region7: #{tpu_custom_call.1} parent=1 // pred_check_branch
      %20 = sbr.rel (0) target = $region9
    $region8: #{tpu_custom_call.1} parent=1 // pred_region
      %22 = dma.done [#allocation3], 256
    $region9: #{tpu_custom_call.1} parent=1 // pred_fallthru
      _
    %v23 = vld [vmem:[#allocation2] sm:$0xff]
    %v24 = vld [vmem:[#allocation2 + $0x8] sm:$0xff]
    %25 = vst [vmem:[#allocation5] sm:$0xff] %v23
    %26 = vst [vmem:[#allocation5 + $0x8] sm:$0xff] %v24
    // Predicated region
    $region10: #{tpu_custom_call.1} parent=1 // pred_check
      _
    $region11: #{tpu_custom_call.1} parent=1 // pred_check_branch
      %28 = sbr.rel (0) target = $region13
    $region12: #{tpu_custom_call.1} parent=1 // pred_region
      %30 = vsyncadd [#allocation4], 0
      %s32 = sshll.u32 [#allocation5], 4
      %s33 = int_to_ptr.vmem [resolvable:$true] %s32
      %s34 = sshll.u32 %s1, 4
      %s35 = int_to_ptr.hbm [resolvable:$true] %s34
      %37 = dma.vmem_to_hbm [thread:$0]  %s33, 256, %s35, [#allocation4]
    $region13: #{tpu_custom_call.1} parent=1 // pred_fallthru
      _
    // Predicated region
    $region14: #{tpu_custom_call.1} parent=1 // pred_check
      _
    $region15: #{tpu_custom_call.1} parent=1 // pred_check_branch
      %39 = sbr.rel (0) target = $region17
    $region16: #{tpu_custom_call.1} parent=1 // pred_region
      %41 = dma.done [#allocation4], 256
    $region17: #{tpu_custom_call.1} parent=1 // pred_fallthru
      _
    %42 = vsyncpa [#allocation3], 1
    %43 = vsyncpa [#allocation4], 1

</llo_original>
